<compile_context>
chip_gen: v6e
topology: v6e:2x2x1
jax: 0.10.0
libtpu: 0.0.40
codegen_flags: <defaults>
</compile_context>

<pallas_src>
import functools
import math

import jax
import jax.numpy as jnp
import numpy as np
from jax import lax
from jax.experimental import pallas as pl
from jax.experimental.pallas import tpu as pltpu

_LANE = 128
_BLOCK_BYTES = 1 << 20        # ~1 MiB per input per grid step
_MAX_ROW_SUBBLOCKS = 64       # bounds static unrolling of the per-row epilogue


def _round_up(x, m):
    return ((x + m - 1) // m) * m


def _round_down(x, m):
    return (x // m) * m


def _cdiv(a, b):
    return -(-a // b)


def _safe_div(num, den):
    # smp zero_division handling: 0/0 -> 0.
    good = den > 0.0
    return jnp.where(good, num / jnp.where(good, den, 1.0), 0.0)


def _metrics_slab(tp, sp, st, shape):
    """Pack per-row [iou, precision, recall, f1] into lanes 0..3 of a (rows, 128) slab."""
    fp = sp - tp
    fn = st - tp
    iou = _safe_div(tp, tp + fp + fn)
    prec = _safe_div(tp, sp)
    rec = _safe_div(tp, st)
    f1 = _safe_div(2.0 * tp, 2.0 * tp + fp + fn)
    lane = lax.broadcasted_iota(jnp.int32, shape, 1)
    return (jnp.where(lane == 0, iou, 0.0) + jnp.where(lane == 1, prec, 0.0)
            + jnp.where(lane == 2, rec, 0.0) + jnp.where(lane == 3, f1, 0.0))


def _make_kernel(*, threshold, hw, rsub, nsub, tl, chunk, n_lblk, need_mask):
    multi = n_lblk > 1

    def _thresholded(pred_ref, tgt_ref, r0, c0, w, valid=None):
        # Threshold in the native dtype; the 0/1 cast + float mul/adds are the
        # only per-element VALU work (8 ops/elem in the hot loop).
        p = pred_ref[r0:r0 + rsub, c0:c0 + w] >= threshold
        t = tgt_ref[r0:r0 + rsub, c0:c0 + w] >= threshold
        if valid is not None:
            p = jnp.logical_and(p, valid)
            t = jnp.logical_and(t, valid)
        return p.astype(jnp.float32), t.astype(jnp.float32)

    def kernel(pred_ref, tgt_ref, out_ref, *scratch):
        if multi:
            (acc_ref,) = scratch
            li = pl.program_id(1)

            @pl.when(li == 0)
            def _init():
                acc_ref[...] = jnp.zeros_like(acc_ref)

            lane_iota = None
            if need_mask:
                lane_iota = lax.broadcasted_iota(jnp.int32, (rsub, chunk), 1)

            n_chunks = tl // chunk
            zeros = jnp.zeros((rsub, chunk), jnp.float32)
            tp_a, sp_a, st_a = zeros, zeros, zeros
            for k in range(n_chunks):
                c0 = k * chunk
                valid = None
                if need_mask:
                    valid = lane_iota < (hw - li * tl - c0)
                pf, tf = _thresholded(pred_ref, tgt_ref, 0, c0, chunk, valid)
                tp_a = tp_a + pf * tf
                sp_a = sp_a + pf
                st_a = st_a + tf
            acc_ref[0] += tp_a
            acc_ref[1] += sp_a
            acc_ref[2] += st_a

            @pl.when(li == n_lblk - 1)
            def _finalize():
                tp = jnp.sum(acc_ref[0], axis=-1, keepdims=True)
                sp = jnp.sum(acc_ref[1], axis=-1, keepdims=True)
                st = jnp.sum(acc_ref[2], axis=-1, keepdims=True)
                out_ref[...] = _metrics_slab(tp, sp, st, out_ref.shape)
        else:
            # Single spatial tile: finalize per row sub-block straight from
            # registers (no VMEM accumulator round-trips, no pl.when phases).
            n_full = hw // chunk
            rem = hw - n_full * chunk
            for s in range(nsub):
                r0 = s * rsub
                tp = jnp.zeros((rsub, 1), jnp.float32)
                sp = jnp.zeros((rsub, 1), jnp.float32)
                st = jnp.zeros((rsub, 1), jnp.float32)
                if n_full:
                    zeros = jnp.zeros((rsub, chunk), jnp.float32)
                    tp_a, sp_a, st_a = zeros, zeros, zeros
                    for k in range(n_full):
                        pf, tf = _thresholded(pred_ref, tgt_ref, r0, k * chunk, chunk)
                        tp_a = tp_a + pf * tf
                        sp_a = sp_a + pf
                        st_a = st_a + tf
                    tp = tp + jnp.sum(tp_a, axis=-1, keepdims=True)
                    sp = sp + jnp.sum(sp_a, axis=-1, keepdims=True)
                    st = st + jnp.sum(st_a, axis=-1, keepdims=True)
                if rem:
                    pf, tf = _thresholded(pred_ref, tgt_ref, r0, n_full * chunk, rem)
                    tp = tp + jnp.sum(pf * tf, axis=-1, keepdims=True)
                    sp = sp + jnp.sum(pf, axis=-1, keepdims=True)
                    st = st + jnp.sum(tf, axis=-1, keepdims=True)
                out_ref[r0:r0 + rsub, :] = _metrics_slab(tp, sp, st, (rsub, _LANE))

    return kernel


@functools.partial(jax.jit, static_argnames=("threshold",))
def metrics_per_class(pred, target, threshold=0.5):
    """(N, C, *spatial) -> (C, 4) float32 [iou, precision, recall, f1], summed over batch."""
    n, c = pred.shape[0], pred.shape[1]
    rows = n * c
    hw = int(math.prod(pred.shape[2:])) if pred.ndim > 2 else 1

    # Keep 16/32-bit floats native (halves HBM traffic for bf16/fp16).
    # TODO(synk): integer/bool inputs are cast once to f32 (one extra HBM copy);
    #             a native integer-compare path would avoid it.
    float_ok = (jnp.float32, jnp.bfloat16, jnp.float16)
    if pred.dtype not in float_ok:
        pred = pred.astype(jnp.float32)
    if target.dtype not in float_ok:
        target = target.astype(jnp.float32)

    pred2 = pred.reshape(rows, hw)
    tgt2 = target.reshape(rows, hw)

    isz_p = pred2.dtype.itemsize
    isz_t = tgt2.dtype.itemsize
    # Row sub-block matches the native sublane packing of the narrowest dtype.
    rsub = 16 if min(isz_p, isz_t) == 2 else 8
    chunk = 512 if rsub == 8 else 256
    elems = _BLOCK_BYTES // max(isz_p, isz_t)   # per-input elements per grid step

    hw_pad = _round_up(hw, _LANE)

    if rows < rsub:
        rsub = rows          # full-dim row block (allowed: equals the array dim)

    if rsub * hw_pad <= elems:
        # Single spatial tile: lane block = full hw; grow the row block toward ~1 MiB.
        tl = hw
        tr = max(rsub, _round_down(elems // max(tl, 1), rsub))
        tr = min(tr, max(_round_down(rows, rsub), rsub), rsub * _MAX_ROW_SUBBLOCKS)
        n_lblk = 1
        need_mask = False
    else:
        # Spatial split: minimal row block, ~1 MiB lane tile; ragged last tile
        # is masked in-kernel (no wrapper-side padding copy).
        tr = rsub
        tl = max(_LANE, _round_down(elems // rsub, _LANE))
        for cand in (chunk, 256, 128):
            if tl % cand == 0:
                chunk = cand
                break
        n_lblk = _cdiv(hw, tl)
        need_mask = (hw % tl) != 0

    nsub = tr // rsub
    n_rblk = _cdiv(rows, tr)
    out_rows = n_rblk * tr

    kernel = _make_kernel(threshold=float(threshold), hw=hw, rsub=rsub, nsub=nsub,
                          tl=tl, chunk=chunk, n_lblk=n_lblk, need_mask=need_mask)

    if n_lblk > 1:
        grid = (n_rblk, n_lblk)
        in_specs = [pl.BlockSpec((tr, tl), lambda ri, li: (ri, li)),
                    pl.BlockSpec((tr, tl), lambda ri, li: (ri, li))]
        out_specs = pl.BlockSpec((tr, _LANE), lambda ri, li: (ri, 0))
        scratch = [pltpu.VMEM((3, tr, chunk), jnp.float32)]
        dim_sem = ("parallel", "arbitrary")
    else:
        grid = (n_rblk,)
        in_specs = [pl.BlockSpec((tr, tl), lambda ri: (ri, 0)),
                    pl.BlockSpec((tr, tl), lambda ri: (ri, 0))]
        out_specs = pl.BlockSpec((tr, _LANE), lambda ri: (ri, 0))
        scratch = []
        dim_sem = ("parallel",)

    out = pl.pallas_call(
        kernel,
        out_shape=jax.ShapeDtypeStruct((out_rows, _LANE), jnp.float32),
        grid=grid,
        in_specs=in_specs,
        out_specs=out_specs,
        scratch_shapes=scratch,
        compiler_params=pltpu.CompilerParams(
            dimension_semantics=dim_sem,
            vmem_limit_bytes=32 * 1024 * 1024),
    )(pred2, tgt2)

    per_rc = out[:rows, :4].reshape(n, c, 4)   # (N, C, [iou, prec, rec, f1])
    return per_rc.sum(axis=0)                  # (C, 4) batch-summed metrics


def metrics_forward(pred, target, threshold=0.5):
    """Equivalent of Metrics.forward for pred/target of shape (N, C, H, W)."""
    n, c = int(pred.shape[0]), int(pred.shape[1])
    assert c >= 2, "Metrics expects at least 2 channels (background, building)"
    per_class = np.asarray(metrics_per_class(pred, target, threshold=float(threshold)))

    def channel(ch):
        return {'iou': float(per_class[ch, 0]),
                'precision': float(per_class[ch, 1]),
                'recall': float(per_class[ch, 2]),
                'f1score': float(per_class[ch, 3])}

    return {'batch_size': n, 'background': channel(0), 'building': channel(1)}


def _reference(pred, target, threshold):
    n, c = pred.shape[0], pred.shape[1]
    p = np.asarray(jnp.asarray(pred, jnp.float32)).reshape(n, c, -1) >= threshold
    t = np.asarray(jnp.asarray(target, jnp.float32)).reshape(n, c, -1) >= threshold
    tp = (p & t).sum(-1).astype(np.float64)
    fp = p.sum(-1) - tp
    fn = t.sum(-1) - tp

    def sd(num, den):
        num = np.asarray(num, np.float64)
        den = np.asarray(den, np.float64)
        return np.divide(num, den, out=np.zeros_like(num), where=den > 0)

    return np.stack([sd(tp, tp + fp + fn), sd(tp, tp + fp), sd(tp, tp + fn),
                     sd(2 * tp, 2 * tp + fp + fn)], axis=-1).sum(axis=0)  # (C, 4)


if __name__ == "__main__":
    key = jax.random.PRNGKey(0)

    cases = [
        ((2, 2, 16, 16), jnp.float32),     # aligned spatial, single-tile path
        ((2, 2, 15, 17), jnp.float32),     # ragged spatial, no wrapper pad
        ((2, 3, 16, 16), jnp.bfloat16),    # 16-bit native dtype path
        ((2, 4, 184, 184), jnp.float32),   # spatial split (multi lane tile) + ragged last tile
    ]
    for idx, (shape, dtype) in enumerate(cases):
        kp, kt = jax.random.split(jax.random.fold_in(key, idx))
        pred = jax.random.uniform(kp, shape, dtype=jnp.float32).astype(dtype)
        target = (jax.random.uniform(kt, shape, dtype=jnp.float32) > 0.5).astype(dtype)
        got = jax.block_until_ready(metrics_per_class(pred, target, threshold=0.5))
        ref = _reference(pred, target, 0.5)
        np.testing.assert_allclose(np.asarray(got, np.float64), ref, rtol=1e-5, atol=1e-5)

    # Module-style forward (background / building dicts), small canonical shape.
    kp, kt = jax.random.split(jax.random.fold_in(key, 100))
    pred = jax.random.uniform(kp, (2, 2, 16, 16), dtype=jnp.float32)
    target = (jax.random.uniform(kt, (2, 2, 16, 16), dtype=jnp.float32) > 0.5).astype(jnp.float32)
    result = metrics_forward(pred, target, threshold=0.5)
    assert result['batch_size'] == 2
    for cls in ('background', 'building'):
        for name, val in result[cls].items():
            assert 0.0 <= val <= result['batch_size'] + 1e-5, (cls, name, val)

    print("KERNEL_OK")
</pallas_src>

<mosaic_0001>
module attributes {stable_mosaic.version = 11 : i64} {
  func.func @kernel(%arg0: i32, %arg1: memref<4x256xf32, #tpu.memory_space<vmem>>, %arg2: memref<4x256xf32, #tpu.memory_space<vmem>>, %arg3: memref<4x128xf32, #tpu.memory_space<vmem>>) attributes {dimension_semantics = [#tpu.dimension_semantics<parallel>], iteration_bounds = array<i64: 1>, scalar_prefetch = 0 : i64, scratch_operands = 0 : i64, tpu.core_type = #tpu.core_type<tc>, window_params = [{transform_indices = @transform_0, window_bounds = array<i64: 4, 256>}, {transform_indices = @transform_1, window_bounds = array<i64: 4, 256>}, {transform_indices = @transform_2, window_bounds = array<i64: 4, 128>}]} {
    %cst = arith.constant 0.000000e+00 : f32
    %0 = vector.broadcast %cst : f32 to vector<4x1xf32>
    %cst_0 = arith.constant 0.000000e+00 : f32
    %1 = vector.broadcast %cst_0 : f32 to vector<4x1xf32>
    %cst_1 = arith.constant 0.000000e+00 : f32
    %2 = vector.broadcast %cst_1 : f32 to vector<4x1xf32>
    %c0 = arith.constant 0 : index
    %c0_2 = arith.constant 0 : index
    %3 = vector.load %arg1[%c0, %c0_2] : memref<4x256xf32, #tpu.memory_space<vmem>>, vector<4x256xf32>
    %cst_3 = arith.constant 5.000000e-01 : f32
    %4 = vector.broadcast %cst_3 : f32 to vector<4x256xf32>
    %5 = arith.cmpf oge, %3, %4 : vector<4x256xf32>
    %c0_4 = arith.constant 0 : index
    %c0_5 = arith.constant 0 : index
    %6 = vector.load %arg2[%c0_4, %c0_5] : memref<4x256xf32, #tpu.memory_space<vmem>>, vector<4x256xf32>
    %cst_6 = arith.constant 5.000000e-01 : f32
    %7 = vector.broadcast %cst_6 : f32 to vector<4x256xf32>
    %8 = arith.cmpf oge, %6, %7 : vector<4x256xf32>
    %9 = arith.extui %5 : vector<4x256xi1> to vector<4x256xi32>
    %10 = arith.sitofp %9 : vector<4x256xi32> to vector<4x256xf32>
    %11 = arith.extui %8 : vector<4x256xi1> to vector<4x256xi32>
    %12 = arith.sitofp %11 : vector<4x256xi32> to vector<4x256xf32>
    %13 = arith.mulf %10, %12 : vector<4x256xf32>
    %cst_7 = arith.constant dense<0.000000e+00> : vector<4xf32>
    %14 = vector.multi_reduction <add>, %13, %cst_7 [1] : vector<4x256xf32> to vector<4xf32>
    %15 = vector.shape_cast %14 : vector<4xf32> to vector<4x1xf32>
    %16 = arith.addf %0, %15 : vector<4x1xf32>
    %cst_8 = arith.constant dense<0.000000e+00> : vector<4xf32>
    %17 = vector.multi_reduction <add>, %10, %cst_8 [1] : vector<4x256xf32> to vector<4xf32>
    %18 = vector.shape_cast %17 : vector<4xf32> to vector<4x1xf32>
    %19 = arith.addf %1, %18 : vector<4x1xf32>
    %cst_9 = arith.constant dense<0.000000e+00> : vector<4xf32>
    %20 = vector.multi_reduction <add>, %12, %cst_9 [1] : vector<4x256xf32> to vector<4xf32>
    %21 = vector.shape_cast %20 : vector<4xf32> to vector<4x1xf32>
    %22 = arith.addf %2, %21 : vector<4x1xf32>
    %23 = arith.subf %19, %16 : vector<4x1xf32>
    %24 = arith.subf %22, %16 : vector<4x1xf32>
    %25 = arith.addf %16, %23 : vector<4x1xf32>
    %26 = arith.addf %25, %24 : vector<4x1xf32>
    %cst_10 = arith.constant 0.000000e+00 : f32
    %27 = vector.broadcast %cst_10 : f32 to vector<4x1xf32>
    %28 = arith.cmpf ogt, %26, %27 : vector<4x1xf32>
    %cst_11 = arith.constant 1.000000e+00 : f32
    %29 = vector.broadcast %cst_11 : f32 to vector<4x1xf32>
    %30 = arith.select %28, %26, %29 : vector<4x1xi1>, vector<4x1xf32>
    %31 = arith.divf %16, %30 : vector<4x1xf32>
    %cst_12 = arith.constant 0.000000e+00 : f32
    %32 = vector.broadcast %cst_12 : f32 to vector<4x1xf32>
    %33 = arith.select %28, %31, %32 : vector<4x1xi1>, vector<4x1xf32>
    %cst_13 = arith.constant 0.000000e+00 : f32
    %34 = vector.broadcast %cst_13 : f32 to vector<4x1xf32>
    %35 = arith.cmpf ogt, %19, %34 : vector<4x1xf32>
    %cst_14 = arith.constant 1.000000e+00 : f32
    %36 = vector.broadcast %cst_14 : f32 to vector<4x1xf32>
    %37 = arith.select %35, %19, %36 : vector<4x1xi1>, vector<4x1xf32>
    %38 = arith.divf %16, %37 : vector<4x1xf32>
    %cst_15 = arith.constant 0.000000e+00 : f32
    %39 = vector.broadcast %cst_15 : f32 to vector<4x1xf32>
    %40 = arith.select %35, %38, %39 : vector<4x1xi1>, vector<4x1xf32>
    %cst_16 = arith.constant 0.000000e+00 : f32
    %41 = vector.broadcast %cst_16 : f32 to vector<4x1xf32>
    %42 = arith.cmpf ogt, %22, %41 : vector<4x1xf32>
    %cst_17 = arith.constant 1.000000e+00 : f32
    %43 = vector.broadcast %cst_17 : f32 to vector<4x1xf32>
    %44 = arith.select %42, %22, %43 : vector<4x1xi1>, vector<4x1xf32>
    %45 = arith.divf %16, %44 : vector<4x1xf32>
    %cst_18 = arith.constant 0.000000e+00 : f32
    %46 = vector.broadcast %cst_18 : f32 to vector<4x1xf32>
    %47 = arith.select %42, %45, %46 : vector<4x1xi1>, vector<4x1xf32>
    %cst_19 = arith.constant 2.000000e+00 : f32
    %48 = vector.broadcast %cst_19 : f32 to vector<4x1xf32>
    %49 = arith.mulf %48, %16 : vector<4x1xf32>
    %cst_20 = arith.constant 2.000000e+00 : f32
    %50 = vector.broadcast %cst_20 : f32 to vector<4x1xf32>
    %51 = arith.mulf %50, %16 : vector<4x1xf32>
    %52 = arith.addf %51, %23 : vector<4x1xf32>
    %53 = arith.addf %52, %24 : vector<4x1xf32>
    %cst_21 = arith.constant 0.000000e+00 : f32
    %54 = vector.broadcast %cst_21 : f32 to vector<4x1xf32>
    %55 = arith.cmpf ogt, %53, %54 : vector<4x1xf32>
    %cst_22 = arith.constant 1.000000e+00 : f32
    %56 = vector.broadcast %cst_22 : f32 to vector<4x1xf32>
    %57 = arith.select %55, %53, %56 : vector<4x1xi1>, vector<4x1xf32>
    %58 = arith.divf %49, %57 : vector<4x1xf32>
    %cst_23 = arith.constant 0.000000e+00 : f32
    %59 = vector.broadcast %cst_23 : f32 to vector<4x1xf32>
    %60 = arith.select %55, %58, %59 : vector<4x1xi1>, vector<4x1xf32>
    %61 = tpu.iota {dimensions = array<i32: 1>} : vector<4x128xi32>
    %c0_i32 = arith.constant 0 : i32
    %62 = vector.broadcast %c0_i32 : i32 to vector<4x128xi32>
    %63 = arith.cmpi eq, %61, %62 : vector<4x128xi32>
    %cst_24 = arith.constant 0.000000e+00 : f32
    %64 = vector.shape_cast %33 : vector<4x1xf32> to vector<4x1xf32>
    %65 = vector.broadcast %64 : vector<4x1xf32> to vector<4x128xf32>
    %66 = vector.broadcast %cst_24 : f32 to vector<4x128xf32>
    %67 = arith.select %63, %65, %66 : vector<4x128xi1>, vector<4x128xf32>
    %c1_i32 = arith.constant 1 : i32
    %68 = vector.broadcast %c1_i32 : i32 to vector<4x128xi32>
    %69 = arith.cmpi eq, %61, %68 : vector<4x128xi32>
    %cst_25 = arith.constant 0.000000e+00 : f32
    %70 = vector.shape_cast %40 : vector<4x1xf32> to vector<4x1xf32>
    %71 = vector.broadcast %70 : vector<4x1xf32> to vector<4x128xf32>
    %72 = vector.broadcast %cst_25 : f32 to vector<4x128xf32>
    %73 = arith.select %69, %71, %72 : vector<4x128xi1>, vector<4x128xf32>
    %74 = arith.addf %67, %73 : vector<4x128xf32>
    %c2_i32 = arith.constant 2 : i32
    %75 = vector.broadcast %c2_i32 : i32 to vector<4x128xi32>
    %76 = arith.cmpi eq, %61, %75 : vector<4x128xi32>
    %cst_26 = arith.constant 0.000000e+00 : f32
    %77 = vector.shape_cast %47 : vector<4x1xf32> to vector<4x1xf32>
    %78 = vector.broadcast %77 : vector<4x1xf32> to vector<4x128xf32>
    %79 = vector.broadcast %cst_26 : f32 to vector<4x128xf32>
    %80 = arith.select %76, %78, %79 : vector<4x128xi1>, vector<4x128xf32>
    %81 = arith.addf %74, %80 : vector<4x128xf32>
    %c3_i32 = arith.constant 3 : i32
    %82 = vector.broadcast %c3_i32 : i32 to vector<4x128xi32>
    %83 = arith.cmpi eq, %61, %82 : vector<4x128xi32>
    %cst_27 = arith.constant 0.000000e+00 : f32
    %84 = vector.shape_cast %60 : vector<4x1xf32> to vector<4x1xf32>
    %85 = vector.broadcast %84 : vector<4x1xf32> to vector<4x128xf32>
    %86 = vector.broadcast %cst_27 : f32 to vector<4x128xf32>
    %87 = arith.select %83, %85, %86 : vector<4x128xi1>, vector<4x128xf32>
    %88 = arith.addf %81, %87 : vector<4x128xf32>
    %c0_28 = arith.constant 0 : index
    %c0_29 = arith.constant 0 : index
    %89 = vector.load %arg3[%c0_28, %c0_29] : memref<4x128xf32, #tpu.memory_space<vmem>>, vector<4x128xf32>
    tpu.vector_store %arg3[%c0_28, %c0_29], %88 {strides = array<i32>} : memref<4x128xf32, #tpu.memory_space<vmem>>, vector<4x128xf32>,
    return
  }
  func.func @transform_0(%arg0: i32) -> (i32, i32) {
    %c0_i32 = arith.constant 0 : i32
    %c0_i32_0 = arith.constant 0 : i32
    return %arg0, %c0_i32 : i32, i32
  }
  func.func @transform_1(%arg0: i32) -> (i32, i32) {
    %c0_i32 = arith.constant 0 : i32
    %c0_i32_0 = arith.constant 0 : i32
    return %arg0, %c0_i32 : i32, i32
  }
  func.func @transform_2(%arg0: i32) -> (i32, i32) {
    %c0_i32 = arith.constant 0 : i32
    %c0_i32_0 = arith.constant 0 : i32
    return %arg0, %c0_i32 : i32, i32
  }
}

</mosaic_0001>

<llo_original>
// kernel: metrics_per_class.1
$region0: #{metrics_per_class.1}
  #allocation0 [shape = 'u32[]', space=smem, size = 0x4, offset = 0x4, fixed_abs, tag = 'smem constant byte address 0x4 - core index']
  #allocation1 [shape = 'u32[144,128]{1,0:T(1,128)}', space=vmem, size = 0x12000, scoped, tag = 'internal scratch']
  %s0 = inlined_call_operand.vmem [shape: f32[4,256], index: 0, kind: input, shape index: {}]
  %s1 = inlined_call_operand.vmem [shape: f32[4,256], index: 1, kind: input, shape index: {}]
  %s2 = inlined_call_operand.vmem [shape: f32[4,128], index: 2, kind: output, shape index: {}]
  %s3 = sld [smem:[#allocation0]]
  $region18: #{metrics_per_class.1} parent=0
    _
  %s5 = ssub.s32 1, %s3
  %s6 = scalar_select 0, %s5, %s3
  // Predicated region
  $region2: #{metrics_per_class.1} parent=0 // pred_check
    _
  $region3: #{metrics_per_class.1} parent=0 // pred_check_branch
    %8 = sbr.rel (0) target = $region5
  $region4: #{metrics_per_class.1} parent=0 // pred_region
    _
  $region5: #{metrics_per_class.1} parent=0 // pred_fallthru
    _
  // Predicated region
  $region6: #{metrics_per_class.1} parent=0 // pred_check
    _
  $region7: #{metrics_per_class.1} parent=0 // pred_check_branch
    %10 = sbr.rel (0) target = $region9
  $region8: #{metrics_per_class.1} parent=0 // pred_region
    _
  $region9: #{metrics_per_class.1} parent=0 // pred_fallthru
    _
  %v11 = vld [vmem:[%s0] sm:$0xff]
  %vm12 = vcmp.ge.f32.partialorder %v11, 0.5
  %v13 = vld [vmem:[%s1] sm:$0xff]
  %vm14 = vcmp.ge.f32.partialorder %v13, 0.5
  %v15 = vsel %vm12, 1, 0
  %v16 = vcvt.s32.f32 %v15
  %v17 = vsel %vm14, 1, 0
  %v18 = vcvt.s32.f32 %v17
  %v19 = vmul.f32 %v16, %v18
  %v21 = vcombine.high %v19, %v19
  %vm23 = vcmask 1043456
  %v24 = vsel %vm23, %v19, 0.0
  %v25 = vsel %vm23, %v21, 0.0
  %v26 = vadd.f32 %v24, %v25
  %27 = vadd.xlane.f32.xlu0 %v26
  %v28 = vpop.xlane.xlu0 %27
  %v29 = vadd.f32 %v28, 0.0
  %v31 = vcombine.high %v16, %v16
  %v33 = vsel %vm23, %v16, 0.0
  %v34 = vsel %vm23, %v31, 0.0
  %v35 = vadd.f32 %v33, %v34
  %36 = vadd.xlane.f32.xlu0 %v35
  %v37 = vpop.xlane.xlu0 %36
  %v38 = vadd.f32 %v37, 0.0
  %v40 = vcombine.high %v18, %v18
  %v42 = vsel %vm23, %v18, 0.0
  %v43 = vsel %vm23, %v40, 0.0
  %v44 = vadd.f32 %v42, %v43
  %45 = vadd.xlane.f32.xlu0 %v44
  %v46 = vpop.xlane.xlu0 %45
  %v47 = vadd.f32 %v46, 0.0
  %v48 = vsub.f32 %v38, %v29
  %v49 = vsub.f32 %v47, %v29
  %v50 = vadd.f32 %v29, %v48
  %v51 = vadd.f32 %v50, %v49
  %vm52 = vcmp.gt.f32.partialorder %v51, 0.0
  %v53 = vsel %vm52, %v51, 1.0
  %v54 = vrcp.pop %v53
  %v55 = vmul.f32 %v29, %v54
  %v56 = vsel %vm52, %v55, 0.0
  %vm57 = vcmp.gt.f32.partialorder %v38, 0.0
  %v58 = vsel %vm57, %v38, 1.0
  %v59 = vrcp.pop %v58
  %v60 = vmul.f32 %v29, %v59
  %v61 = vsel %vm57, %v60, 0.0
  %vm62 = vcmp.gt.f32.partialorder %v47, 0.0
  %v63 = vsel %vm62, %v47, 1.0
  %v64 = vrcp.pop %v63
  %v65 = vmul.f32 %v29, %v64
  %v66 = vsel %vm62, %v65, 0.0
  %v67 = vmul.f32 %v29, 2.0
  %v68 = vadd.f32 %v67, %v48
  %v69 = vadd.f32 %v68, %v49
  %vm70 = vcmp.gt.f32.partialorder %v69, 0.0
  %v71 = vsel %vm70, %v69, 1.0
  %v72 = vrcp.pop %v71
  %v73 = vmul.f32 %v67, %v72
  %v74 = vsel %vm70, %v73, 0.0
  %v75 = vlaneseq
  %v76 = vand.u32 %v75, 127
  %vm77 = vcmp.eq.s32.totalorder %v76, 0
  %v78 = vsel %vm77, %v56, 0.0
  %vm79 = vcmp.eq.s32.totalorder %v76, 1
  %v80 = vsel %vm79, %v61, 0.0
  %v81 = vadd.f32 %v78, %v80
  %vm82 = vcmp.eq.s32.totalorder %v76, 2
  %v83 = vsel %vm82, %v66, 0.0
  %v84 = vadd.f32 %v81, %v83
  %vm85 = vcmp.eq.s32.totalorder %v76, 3
  %v86 = vsel %vm85, %v74, 0.0
  %v87 = vadd.f32 %v84, %v86
  %88 = vst [vmem:[%s2] sm:$0xf] %v87
  // Predicated region
  $region10: #{metrics_per_class.1} parent=0 // pred_check
    _
  $region11: #{metrics_per_class.1} parent=0 // pred_check_branch
    %90 = sbr.rel (0) target = $region13
  $region12: #{metrics_per_class.1} parent=0 // pred_region
    _
  $region13: #{metrics_per_class.1} parent=0 // pred_fallthru
    _
  // Predicated region
  $region14: #{metrics_per_class.1} parent=0 // pred_check
    _
  $region15: #{metrics_per_class.1} parent=0 // pred_check_branch
    %92 = sbr.rel (0) target = $region17
  $region16: #{metrics_per_class.1} parent=0 // pred_region
    _
  $region17: #{metrics_per_class.1} parent=0 // pred_fallthru
    _

</llo_original>
